<compile_context>
chip_gen: v7x
topology: tpu7x:2x2x1
jax: 0.10.0
libtpu: 0.0.40
codegen_flags: <defaults>
</compile_context>

<pallas_src>
import functools

import jax
import jax.numpy as jnp
from jax.experimental import pallas as pl
from jax.experimental.pallas import tpu as pltpu

LANE = 128
SUBLANE = 8


def _round_up(n, m):
    return ((n + m - 1) // m) * m


def _pad2(a, rows, cols):
    return jnp.pad(a, ((0, rows - a.shape[0]), (0, cols - a.shape[1])))


def mlp_kernel(x_ref, w1_ref, b1_ref, w2_ref, b2_ref, w3_ref, b3_ref, o_ref, xpad_ref):
    # x_ref:   (tb, d_in)   f32, streamed over the batch grid axis
    # w*_ref:  padded, VMEM-resident (constant index_map); w1/w2/w3 in compute dtype
    # b*_ref:  (1, 128-mult) f32, VMEM-resident
    # o_ref:   (tb, out_dim) f32 (true output width -> tiny writeback)
    # xpad_ref: (tb, d_in_p) compute-dtype staging scratch for the lane-padded input
    d_in = x_ref.shape[-1]
    out_dim = o_ref.shape[-1]
    compute_dtype = xpad_ref.dtype

    # Cast + zero-pad the activation tile to 128 lanes entirely inside VMEM
    # (never touches HBM).  Full zero-fill then offset-0 overwrite: both stores aligned.
    xpad_ref[...] = jnp.zeros_like(xpad_ref)
    xpad_ref[:, :d_in] = x_ref[...].astype(compute_dtype)
    x = xpad_ref[...]

    h1 = jnp.dot(x, w1_ref[...], preferred_element_type=jnp.float32) + b1_ref[...]
    h1 = jnp.maximum(h1, 0.0).astype(compute_dtype)        # ReLU epilogue in f32
    h2 = jnp.dot(h1, w2_ref[...], preferred_element_type=jnp.float32) + b2_ref[...]
    h2 = jnp.maximum(h2, 0.0).astype(compute_dtype)        # ReLU epilogue in f32
    out = jnp.dot(h2, w3_ref[...], preferred_element_type=jnp.float32) + b3_ref[...]
    o_ref[...] = out[:, :out_dim].astype(o_ref.dtype)


def prepare_params(params, *, compute_dtype=jnp.bfloat16):
    """Pad feature dims to 128 lanes and cast weights once, outside the per-call path."""
    w1, b1, w2, b2, w3, b3 = params
    d_in, h1d = w1.shape
    h2d = w2.shape[1]
    out_dim = w3.shape[1]

    d_in_p = _round_up(d_in, LANE)
    h1_p = _round_up(h1d, LANE)
    h2_p = _round_up(h2d, LANE)
    out_p = _round_up(out_dim, LANE)

    w1_p = _pad2(w1, d_in_p, h1_p).astype(compute_dtype)
    w2_p = _pad2(w2, h1_p, h2_p).astype(compute_dtype)
    w3_p = _pad2(w3, h2_p, out_p).astype(compute_dtype)
    b1_p = _pad2(b1.reshape(1, -1), 1, h1_p).astype(jnp.float32)
    b2_p = _pad2(b2.reshape(1, -1), 1, h2_p).astype(jnp.float32)
    b3_p = _pad2(b3.reshape(1, -1), 1, out_p).astype(jnp.float32)
    prepared = (w1_p, b1_p, w2_p, b2_p, w3_p, b3_p)
    return prepared, d_in, out_dim


@functools.partial(jax.jit, static_argnames=("d_in", "out_dim", "block_b"))
def nn_classifier_forward(x, prepared_params, d_in, out_dim, *, block_b=2048):
    """Forward pass equivalent to the PyTorch NNClassifier (logits, f32)."""
    w1_p, b1_p, w2_p, b2_p, w3_p, b3_p = prepared_params
    compute_dtype = w2_p.dtype
    B = x.shape[0]
    d_in_p = w1_p.shape[0]

    # Batch tile: sublane-aligned, at most block_b; prefer >=2 grid steps so the
    # "parallel" batch axis can shard across v7x's two TensorCores.
    tb = _round_up(min(block_b, _round_up(B, SUBLANE)), SUBLANE)
    if B > SUBLANE and _round_up(B, tb) // tb < 2:
        tb = _round_up((B + 1) // 2, SUBLANE)
    B_p = _round_up(B, tb)

    x_p = jnp.pad(x, ((0, B_p - B), (0, 0))) if B_p != B else x

    grid = (B_p // tb,)
    resident = lambda shape: pl.BlockSpec(shape, lambda i: (0, 0))  # VMEM-resident

    out = pl.pallas_call(
        mlp_kernel,
        out_shape=jax.ShapeDtypeStruct((B_p, out_dim), jnp.float32),
        grid=grid,
        in_specs=[
            pl.BlockSpec((tb, d_in), lambda i: (i, 0)),   # raw f32 x streams over batch
            resident(w1_p.shape),
            resident(b1_p.shape),
            resident(w2_p.shape),
            resident(b2_p.shape),
            resident(w3_p.shape),
            resident(b3_p.shape),
        ],
        out_specs=pl.BlockSpec((tb, out_dim), lambda i: (i, 0)),
        scratch_shapes=[pltpu.VMEM((tb, d_in_p), compute_dtype)],
        compiler_params=pltpu.CompilerParams(
            dimension_semantics=("parallel",),
        ),
    )(x_p, w1_p, b1_p, w2_p, b2_p, w3_p, b3_p)

    # Padded batch rows carry ReLU(bias)-derived values; slice them off (no-op if B_p==B).
    return out[:B] if B_p != B else out


def init_params(key, input_dim, hidden_dim, output_dim):
    # Deterministic init mimicking nn.Linear's U(-1/sqrt(fan_in), 1/sqrt(fan_in)).
    # Weights stored as (fan_in, fan_out) so y = x @ W + b (== PyTorch x @ W.T).
    ks = jax.random.split(key, 6)

    def linear(kw, kb, fan_in, fan_out):
        bound = 1.0 / jnp.sqrt(fan_in)
        w = jax.random.uniform(kw, (fan_in, fan_out), jnp.float32, -bound, bound)
        b = jax.random.uniform(kb, (1, fan_out), jnp.float32, -bound, bound)
        return w, b

    w1, b1 = linear(ks[0], ks[1], input_dim, hidden_dim)
    w2, b2 = linear(ks[2], ks[3], hidden_dim, hidden_dim)
    w3, b3 = linear(ks[4], ks[5], hidden_dim, output_dim)
    return (w1, b1, w2, b2, w3, b3)


def reference_forward(x, params):
    w1, b1, w2, b2, w3, b3 = params
    h1 = jnp.maximum(x @ w1 + b1, 0.0)
    h2 = jnp.maximum(h1 @ w2 + b2, 0.0)
    return h2 @ w3 + b3


if __name__ == "__main__":
    input_dim = 16     # stands in for X_train.shape[1]
    hidden_dim = 64
    output_dim = 3
    batch = 64         # small; tile heuristic yields a 2-step grid to exercise pipelining

    key = jax.random.PRNGKey(0)
    k_x, k_p = jax.random.split(key)
    x = jax.random.normal(k_x, (batch, input_dim), dtype=jnp.float32)
    params = init_params(k_p, input_dim, hidden_dim, output_dim)

    ref = reference_forward(x, params)

    # 1) f32 compute path: exact check against the reference.
    prep_f32, d_in, out_dim = prepare_params(params, compute_dtype=jnp.float32)
    out_f32 = nn_classifier_forward(x, prep_f32, d_in, out_dim)
    out_f32 = jax.block_until_ready(out_f32)
    assert out_f32.shape == (batch, output_dim)
    assert jnp.allclose(out_f32, ref, atol=1e-5, rtol=1e-5)

    # 2) bf16 compute path (default, per perf guidance): loose tolerance vs f32 reference.
    prep_bf16, d_in, out_dim = prepare_params(params, compute_dtype=jnp.bfloat16)
    out_bf16 = nn_classifier_forward(x, prep_bf16, d_in, out_dim)
    out_bf16 = jax.block_until_ready(out_bf16)
    assert out_bf16.shape == (batch, output_dim)
    assert jnp.allclose(out_bf16, ref, atol=5e-2, rtol=5e-2)

    # 3) Exercise a multi-step grid with an explicit small tile (4 steps).
    out_small_tile = nn_classifier_forward(x, prep_f32, d_in, out_dim, block_b=16)
    out_small_tile = jax.block_until_ready(out_small_tile)
    assert jnp.allclose(out_small_tile, ref, atol=1e-5, rtol=1e-5)

    print("KERNEL_OK")
</pallas_src>

<mosaic_0001>
module attributes {stable_mosaic.version = 11 : i64} {
  func.func @mlp_kernel(%arg0: i32, %arg1: memref<32x16xf32, #tpu.memory_space<vmem>>, %arg2: memref<128x128xf32, #tpu.memory_space<vmem>>, %arg3: memref<1x128xf32, #tpu.memory_space<vmem>>, %arg4: memref<128x128xf32, #tpu.memory_space<vmem>>, %arg5: memref<1x128xf32, #tpu.memory_space<vmem>>, %arg6: memref<128x128xf32, #tpu.memory_space<vmem>>, %arg7: memref<1x128xf32, #tpu.memory_space<vmem>>, %arg8: memref<32x3xf32, #tpu.memory_space<vmem>>, %arg9: memref<32x128xf32, #tpu.memory_space<vmem>>) attributes {dimension_semantics = [#tpu.dimension_semantics<parallel>], iteration_bounds = array<i64: 2>, scalar_prefetch = 0 : i64, scratch_operands = 1 : i64, tpu.core_type = #tpu.core_type<tc>, window_params = [{transform_indices = @transform_0, window_bounds = array<i64: 32, 16>}, {pipeline_mode = #tpu.pipeline_mode<synchronous>, transform_indices = @transform_1, window_bounds = array<i64: 128, 128>}, {pipeline_mode = #tpu.pipeline_mode<synchronous>, transform_indices = @transform_2, window_bounds = array<i64: 1, 128>}, {pipeline_mode = #tpu.pipeline_mode<synchronous>, transform_indices = @transform_3, window_bounds = array<i64: 128, 128>}, {pipeline_mode = #tpu.pipeline_mode<synchronous>, transform_indices = @transform_4, window_bounds = array<i64: 1, 128>}, {pipeline_mode = #tpu.pipeline_mode<synchronous>, transform_indices = @transform_5, window_bounds = array<i64: 128, 128>}, {pipeline_mode = #tpu.pipeline_mode<synchronous>, transform_indices = @transform_6, window_bounds = array<i64: 1, 128>}, {transform_indices = @transform_7, window_bounds = array<i64: 32, 3>}]} {
    %cst = arith.constant 0.000000e+00 : f32
    %0 = vector.broadcast %cst : f32 to vector<32x128xf32>
    %c0 = arith.constant 0 : index
    %c0_0 = arith.constant 0 : index
    %1 = vector.load %arg9[%c0, %c0_0] : memref<32x128xf32, #tpu.memory_space<vmem>>, vector<32x128xf32>
    tpu.vector_store %arg9[%c0, %c0_0], %0 {strides = array<i32>} : memref<32x128xf32, #tpu.memory_space<vmem>>, vector<32x128xf32>,
    %c0_1 = arith.constant 0 : index
    %c0_2 = arith.constant 0 : index
    %2 = vector.load %arg1[%c0_1, %c0_2] : memref<32x16xf32, #tpu.memory_space<vmem>>, vector<32x16xf32>
    %c0_3 = arith.constant 0 : index
    %c0_4 = arith.constant 0 : index
    %3 = vector.load %arg9[%c0_3, %c0_4] : memref<32x128xf32, #tpu.memory_space<vmem>>, vector<32x16xf32>
    tpu.vector_store %arg9[%c0_3, %c0_4], %2 {strides = array<i32>} : memref<32x128xf32, #tpu.memory_space<vmem>>, vector<32x16xf32>,
    %c0_5 = arith.constant 0 : index
    %c0_6 = arith.constant 0 : index
    %4 = vector.load %arg9[%c0_5, %c0_6] : memref<32x128xf32, #tpu.memory_space<vmem>>, vector<32x128xf32>
    %c0_7 = arith.constant 0 : index
    %c0_8 = arith.constant 0 : index
    %5 = vector.load %arg2[%c0_7, %c0_8] : memref<128x128xf32, #tpu.memory_space<vmem>>, vector<128x128xf32>
    %cst_9 = arith.constant dense<0.000000e+00> : vector<32x128xf32>
    %6 = tpu.matmul %4, %5, %cst_9 {dimension_numbers = #tpu.dot_dimension_numbers<[1], [0], [0], [1], [0, 0, 1, 1], [], []>} : vector<32x128xf32>, vector<128x128xf32>, vector<32x128xf32> -> vector<32x128xf32>
    %c0_10 = arith.constant 0 : index
    %c0_11 = arith.constant 0 : index
    %7 = vector.load %arg3[%c0_10, %c0_11] : memref<1x128xf32, #tpu.memory_space<vmem>>, vector<1x128xf32>
    %8 = vector.broadcast %7 : vector<1x128xf32> to vector<32x128xf32>
    %9 = arith.addf %6, %8 : vector<32x128xf32>
    %cst_12 = arith.constant 0.000000e+00 : f32
    %10 = vector.broadcast %cst_12 : f32 to vector<32x128xf32>
    %11 = arith.maximumf %9, %10 : vector<32x128xf32>
    %c0_13 = arith.constant 0 : index
    %c0_14 = arith.constant 0 : index
    %12 = vector.load %arg4[%c0_13, %c0_14] : memref<128x128xf32, #tpu.memory_space<vmem>>, vector<128x128xf32>
    %cst_15 = arith.constant dense<0.000000e+00> : vector<32x128xf32>
    %13 = tpu.matmul %11, %12, %cst_15 {dimension_numbers = #tpu.dot_dimension_numbers<[1], [0], [0], [1], [0, 0, 1, 1], [], []>} : vector<32x128xf32>, vector<128x128xf32>, vector<32x128xf32> -> vector<32x128xf32>
    %c0_16 = arith.constant 0 : index
    %c0_17 = arith.constant 0 : index
    %14 = vector.load %arg5[%c0_16, %c0_17] : memref<1x128xf32, #tpu.memory_space<vmem>>, vector<1x128xf32>
    %15 = vector.broadcast %14 : vector<1x128xf32> to vector<32x128xf32>
    %16 = arith.addf %13, %15 : vector<32x128xf32>
    %cst_18 = arith.constant 0.000000e+00 : f32
    %17 = vector.broadcast %cst_18 : f32 to vector<32x128xf32>
    %18 = arith.maximumf %16, %17 : vector<32x128xf32>
    %c0_19 = arith.constant 0 : index
    %c0_20 = arith.constant 0 : index
    %19 = vector.load %arg6[%c0_19, %c0_20] : memref<128x128xf32, #tpu.memory_space<vmem>>, vector<128x128xf32>
    %cst_21 = arith.constant dense<0.000000e+00> : vector<32x128xf32>
    %20 = tpu.matmul %18, %19, %cst_21 {dimension_numbers = #tpu.dot_dimension_numbers<[1], [0], [0], [1], [0, 0, 1, 1], [], []>} : vector<32x128xf32>, vector<128x128xf32>, vector<32x128xf32> -> vector<32x128xf32>
    %c0_22 = arith.constant 0 : index
    %c0_23 = arith.constant 0 : index
    %21 = vector.load %arg7[%c0_22, %c0_23] : memref<1x128xf32, #tpu.memory_space<vmem>>, vector<1x128xf32>
    %22 = vector.broadcast %21 : vector<1x128xf32> to vector<32x128xf32>
    %23 = arith.addf %20, %22 : vector<32x128xf32>
    %24 = vector.extract_strided_slice %23 {offsets = [0, 0], sizes = [32, 3], strides = [1, 1]} : vector<32x128xf32> to vector<32x3xf32>
    %c0_24 = arith.constant 0 : index
    %c0_25 = arith.constant 0 : index
    %25 = vector.load %arg8[%c0_24, %c0_25] : memref<32x3xf32, #tpu.memory_space<vmem>>, vector<32x3xf32>
    tpu.vector_store %arg8[%c0_24, %c0_25], %24 {strides = array<i32>} : memref<32x3xf32, #tpu.memory_space<vmem>>, vector<32x3xf32>,
    return
  }
  func.func @transform_0(%arg0: i32) -> (i32, i32) {
    %c0_i32 = arith.constant 0 : i32
    %c0_i32_0 = arith.constant 0 : i32
    return %arg0, %c0_i32 : i32, i32
  }
  func.func @transform_1(%arg0: i32) -> (i32, i32) {
    %c0_i32 = arith.constant 0 : i32
    %c0_i32_0 = arith.constant 0 : i32
    %c0_i32_1 = arith.constant 0 : i32
    return %c0_i32, %c0_i32_0 : i32, i32
  }
  func.func @transform_2(%arg0: i32) -> (i32, i32) {
    %c0_i32 = arith.constant 0 : i32
    %c0_i32_0 = arith.constant 0 : i32
    %c0_i32_1 = arith.constant 0 : i32
    return %c0_i32, %c0_i32_0 : i32, i32
  }
  func.func @transform_3(%arg0: i32) -> (i32, i32) {
    %c0_i32 = arith.constant 0 : i32
    %c0_i32_0 = arith.constant 0 : i32
    %c0_i32_1 = arith.constant 0 : i32
    return %c0_i32, %c0_i32_0 : i32, i32
  }
  func.func @transform_4(%arg0: i32) -> (i32, i32) {
    %c0_i32 = arith.constant 0 : i32
    %c0_i32_0 = arith.constant 0 : i32
    %c0_i32_1 = arith.constant 0 : i32
    return %c0_i32, %c0_i32_0 : i32, i32
  }
  func.func @transform_5(%arg0: i32) -> (i32, i32) {
    %c0_i32 = arith.constant 0 : i32
    %c0_i32_0 = arith.constant 0 : i32
    %c0_i32_1 = arith.constant 0 : i32
    return %c0_i32, %c0_i32_0 : i32, i32
  }
  func.func @transform_6(%arg0: i32) -> (i32, i32) {
    %c0_i32 = arith.constant 0 : i32
    %c0_i32_0 = arith.constant 0 : i32
    %c0_i32_1 = arith.constant 0 : i32
    return %c0_i32, %c0_i32_0 : i32, i32
  }
  func.func @transform_7(%arg0: i32) -> (i32, i32) {
    %c0_i32 = arith.constant 0 : i32
    %c0_i32_0 = arith.constant 0 : i32
    return %arg0, %c0_i32 : i32, i32
  }
}

</mosaic_0001>

<llo_original>
// kernel: nn_classifier_forward.1
$region0: #{nn_classifier_forward.1}
  #allocation0 [shape = 'u32[]', space=smem, size = 0x4, offset = 0x4, fixed_abs, tag = 'smem constant byte address 0x4 - core index']
  #allocation1 [shape = 'u32[144,128]{1,0:T(1,128)}', space=vmem, size = 0x12000, scoped, tag = 'internal scratch']
  #allocation2 [shape = 'f32[32,128]{1,0:T(8,128)}', space=vmem, size = 0x4000, scoped, tag = 'scratch operand']
  %s0 = inlined_call_operand.vmem [shape: f32[64,16], index: 0, kind: input, shape index: {}]
  %s1 = inlined_call_operand.hbm [shape: f32[128,128], index: 1, kind: input, shape index: {}]
  %s2 = inlined_call_operand.vmem [shape: f32[1,128], index: 2, kind: input, shape index: {}]
  %s3 = inlined_call_operand.hbm [shape: f32[128,128], index: 3, kind: input, shape index: {}]
  %s4 = inlined_call_operand.vmem [shape: f32[1,128], index: 4, kind: input, shape index: {}]
  %s5 = inlined_call_operand.hbm [shape: f32[128,128], index: 5, kind: input, shape index: {}]
  %s6 = inlined_call_operand.vmem [shape: f32[1,128], index: 6, kind: input, shape index: {}]
  %s7 = inlined_call_operand.vmem [shape: f32[64,3], index: 7, kind: output, shape index: {}]
  %s8 = sld [smem:[#allocation0]]
  $region73: #{nn_classifier_forward.1} parent=0
    _
  %s10 = ssub.s32 1, %s8
  %s11 = scalar_select 0, %s10, %s8
  $region1: #{nn_classifier_forward.1} parent=0
    #allocation3 [shape = 'u8[65536]{0}', space=vmem, size = 0x10000, scoped, tag = 'input window, operand 1, single buffered']
    #allocation4 [shape = 's32[2]{0}', space=sflag, size = 0x8, scoped, tag = 'scoped memory for nn_classifier_forward.1']
    #allocation5 [shape = 'u8[65536]{0}', space=vmem, size = 0x10000, scoped, tag = 'input window, operand 3, single buffered']
    #allocation6 [shape = 's32[1]{0}', space=sflag, size = 0x4, scoped, tag = 'scoped memory for nn_classifier_forward.1']
    #allocation7 [shape = 'u8[65536]{0}', space=vmem, size = 0x10000, scoped, tag = 'input window, operand 5, single buffered']
    %12 = vsyncpa [#allocation4], 0
    %13 = vsyncpa [#allocation6], 0
    loop: start=0, step=1, limit=4
    $region2: #{nn_classifier_forward.1} parent=1 // loop_pre_header
      _
    $region3: #{nn_classifier_forward.1} parent=1 // loop_header
      %s15 = sphi 0, %s19
      %p16 = scmp.ge.s32.totalorder %s15, 4
      %s25 = sphi 0, %s27
      %s28 = sphi 0, %s25
      %s29 = sphi 0, %s28
      %s45 = sphi 0, %s29
      %s49 = sphi 0, %s49
      %s51 = sphi 0, %s49
      %s52 = sphi 0, %s51
      %s66 = sphi 0, %s52
      %s70 = sphi 0, %s70
      %s72 = sphi 0, %s70
      %s73 = sphi 0, %s72
      %s87 = sphi 0, %s73
      %s91 = sphi 0, %s91
      %s93 = sphi 0, %s91
      %s94 = sphi 0, %s93
      %s108 = sphi 0, %s94
      %s112 = sphi 0, %s112
      %s114 = sphi 0, %s112
      %s115 = sphi 0, %s114
      %s129 = sphi 0, %s115
      %s133 = sphi 0, %s133
      %s135 = sphi 0, %s133
      %s136 = sphi 0, %s135
      %s150 = sphi 0, %s136
      %s154 = sphi 0, %s154
      %s156 = sphi 0, %s154
      %s157 = sphi 0, %s156
      %s171 = sphi 0, %s157
      %s177 = sphi 0, %s179
      %s180 = sphi 0, %s177
      %s181 = sphi 0, %s180
      %s197 = sphi 0, %s181
    $region4: #{nn_classifier_forward.1} parent=1 // loop_header_branch
      %18 = sbr.rel (%p16) target = $region8
    $region5: #{nn_classifier_forward.1} parent=1 // loop_body
      %s20 = ssub.s32 %s15, 1
      %s21 = ssub.s32 %s15, 2
      %s22 = sadd.s32 %s15, 1
      %s23 = ssub.s32 %s15, %s22
      %p24 = scmp.eq.s32.totalorder %s23, 0
      %s26 = sadd.s32 %s25, 1
      %s27 = scalar_select %p24, %s25, %s26
      %p30 = pneg %p24
      %p31 = scmp.eq.s32.totalorder %s15, 1
      %p32 = por %p30, %p31
      %p33 = scmp.ne.s32.totalorder %s25, %s28
      %p34 = scmp.eq.s32.totalorder %s15, 0
      %p35 = por %p33, %p34
      %p36 = scmp.ne.s32.totalorder %s25, %s28
      %p37 = scmp.eq.s32.totalorder %s20, 1
      %p38 = por %p36, %p37
      %p39 = scmp.ne.s32.totalorder %s28, %s29
      %p40 = scmp.eq.s32.totalorder %s20, 0
      %p41 = por %p39, %p40
      %p42 = scmp.ne.s32.totalorder %s28, %s29
      %p43 = scmp.eq.s32.totalorder %s21, 1
      %p44 = por %p42, %p43
      %p46 = scmp.ne.s32.totalorder %s29, %s45
      %p47 = scmp.eq.s32.totalorder %s21, 0
      %p48 = por %p46, %p47
      %s50 = sadd.s32 %s49, 1
      %p53 = scmp.eq.s32.totalorder %s15, 1
      %p54 = scmp.ne.s32.totalorder %s49, %s51
      %p55 = scmp.eq.s32.totalorder %s15, 0
      %p56 = por %p54, %p55
      %p57 = scmp.ne.s32.totalorder %s49, %s51
      %p58 = scmp.eq.s32.totalorder %s20, 1
      %p59 = por %p57, %p58
      %p60 = scmp.ne.s32.totalorder %s51, %s52
      %p61 = scmp.eq.s32.totalorder %s20, 0
      %p62 = por %p60, %p61
      %p63 = scmp.ne.s32.totalorder %s51, %s52
      %p64 = scmp.eq.s32.totalorder %s21, 1
      %p65 = por %p63, %p64
      %p67 = scmp.ne.s32.totalorder %s52, %s66
      %p68 = scmp.eq.s32.totalorder %s21, 0
      %p69 = por %p67, %p68
      %s71 = sadd.s32 %s70, 1
      %p74 = scmp.eq.s32.totalorder %s15, 1
      %p75 = scmp.ne.s32.totalorder %s70, %s72
      %p76 = scmp.eq.s32.totalorder %s15, 0
      %p77 = por %p75, %p76
      %p78 = scmp.ne.s32.totalorder %s70, %s72
      %p79 = scmp.eq.s32.totalorder %s20, 1
      %p80 = por %p78, %p79
      %p81 = scmp.ne.s32.totalorder %s72, %s73
      %p82 = scmp.eq.s32.totalorder %s20, 0
      %p83 = por %p81, %p82
      %p84 = scmp.ne.s32.totalorder %s72, %s73
      %p85 = scmp.eq.s32.totalorder %s21, 1
      %p86 = por %p84, %p85
      %p88 = scmp.ne.s32.totalorder %s73, %s87
      %p89 = scmp.eq.s32.totalorder %s21, 0
      %p90 = por %p88, %p89
      %s92 = sadd.s32 %s91, 1
      %p95 = scmp.eq.s32.totalorder %s15, 1
      %p96 = scmp.ne.s32.totalorder %s91, %s93
      %p97 = scmp.eq.s32.totalorder %s15, 0
      %p98 = por %p96, %p97
      %p99 = scmp.ne.s32.totalorder %s91, %s93
      %p100 = scmp.eq.s32.totalorder %s20, 1
      %p101 = por %p99, %p100
      %p102 = scmp.ne.s32.totalorder %s93, %s94
      %p103 = scmp.eq.s32.totalorder %s20, 0
      %p104 = por %p102, %p103
      %p105 = scmp.ne.s32.totalorder %s93, %s94
      %p106 = scmp.eq.s32.totalorder %s21, 1
      %p107 = por %p105, %p106
      %p109 = scmp.ne.s32.totalorder %s94, %s108
      %p110 = scmp.eq.s32.totalorder %s21, 0
      %p111 = por %p109, %p110
      %s113 = sadd.s32 %s112, 1
      %p116 = scmp.eq.s32.totalorder %s15, 1
      %p117 = scmp.ne.s32.totalorder %s112, %s114
      %p118 = scmp.eq.s32.totalorder %s15, 0
      %p119 = por %p117, %p118
      %p120 = scmp.ne.s32.totalorder %s112, %s114
      %p121 = scmp.eq.s32.totalorder %s20, 1
      %p122 = por %p120, %p121
      %p123 = scmp.ne.s32.totalorder %s114, %s115
      %p124 = scmp.eq.s32.totalorder %s20, 0
      %p125 = por %p123, %p124
      %p126 = scmp.ne.s32.totalorder %s114, %s115
      %p127 = scmp.eq.s32.totalorder %s21, 1
      %p128 = por %p126, %p127
      %p130 = scmp.ne.s32.totalorder %s115, %s129
      %p131 = scmp.eq.s32.totalorder %s21, 0
      %p132 = por %p130, %p131
      %s134 = sadd.s32 %s133, 1
      %p137 = scmp.eq.s32.totalorder %s15, 1
      %p138 = scmp.ne.s32.totalorder %s133, %s135
      %p139 = scmp.eq.s32.totalorder %s15, 0
      %p140 = por %p138, %p139
      %p141 = scmp.ne.s32.totalorder %s133, %s135
      %p142 = scmp.eq.s32.totalorder %s20, 1
      %p143 = por %p141, %p142
      %p144 = scmp.ne.s32.totalorder %s135, %s136
      %p145 = scmp.eq.s32.totalorder %s20, 0
      %p146 = por %p144, %p145
      %p147 = scmp.ne.s32.totalorder %s135, %s136
      %p148 = scmp.eq.s32.totalorder %s21, 1
      %p149 = por %p147, %p148
      %p151 = scmp.ne.s32.totalorder %s136, %s150
      %p152 = scmp.eq.s32.totalorder %s21, 0
      %p153 = por %p151, %p152
      %s155 = sadd.s32 %s154, 1
      %p158 = scmp.eq.s32.totalorder %s15, 1
      %p159 = scmp.ne.s32.totalorder %s154, %s156
      %p160 = scmp.eq.s32.totalorder %s15, 0
      %p161 = por %p159, %p160
      %p162 = scmp.ne.s32.totalorder %s154, %s156
      %p163 = scmp.eq.s32.totalorder %s20, 1
      %p164 = por %p162, %p163
      %p165 = scmp.ne.s32.totalorder %s156, %s157
      %p166 = scmp.eq.s32.totalorder %s20, 0
      %p167 = por %p165, %p166
      %p168 = scmp.ne.s32.totalorder %s156, %s157
      %p169 = scmp.eq.s32.totalorder %s21, 1
      %p170 = por %p168, %p169
      %p172 = scmp.ne.s32.totalorder %s157, %s171
      %p173 = scmp.eq.s32.totalorder %s21, 0
      %p174 = por %p172, %p173
      %s175 = ssub.s32 %s15, %s22
      %p176 = scmp.eq.s32.totalorder %s175, 0
      %s178 = sadd.s32 %s177, 1
      %s179 = scalar_select %p176, %s177, %s178
      %p182 = pneg %p176
      %p183 = scmp.eq.s32.totalorder %s15, 1
      %p184 = por %p182, %p183
      %p185 = scmp.ne.s32.totalorder %s177, %s180
      %p186 = scmp.eq.s32.totalorder %s15, 0
      %p187 = por %p185, %p186
      %p188 = scmp.ne.s32.totalorder %s177, %s180
      %p189 = scmp.eq.s32.totalorder %s20, 1
      %p190 = por %p188, %p189
      %p191 = scmp.ne.s32.totalorder %s180, %s181
      %p192 = scmp.eq.s32.totalorder %s20, 0
      %p193 = por %p191, %p192
      %p194 = scmp.ne.s32.totalorder %s180, %s181
      %p195 = scmp.eq.s32.totalorder %s21, 1
      %p196 = por %p194, %p195
      %p198 = scmp.ne.s32.totalorder %s181, %s197
      %p199 = scmp.eq.s32.totalorder %s21, 0
      %p200 = por %p198, %p199
      %p201 = scmp.le.s32.totalorder 1, %s15
      %p202 = scmp.lt.s32.totalorder %s15, 3
      %p203 = pnand %p201, %p202
      %p204 = pneg %p203
      // Predicated region
      $region9: #{nn_classifier_forward.1} parent=5 // pred_check
        _
      $region10: #{nn_classifier_forward.1} parent=5 // pred_check_branch
        %206 = sbr.rel (%p203) target = $region12
      $region11: #{nn_classifier_forward.1} parent=5 // pred_region
        %s207 = ssub.s32 %s15, 1
        // Predicated region
        $region13: #{nn_classifier_forward.1} parent=11 // pred_check
          %p208 = pneg %p62
        $region14: #{nn_classifier_forward.1} parent=11 // pred_check_branch
          %210 = sbr.rel (%p208) target = $region16
        $region15: #{nn_classifier_forward.1} parent=11 // pred_region
          %s212 = ssub.s32 2048, 2048
          %213 = vsyncadd [#allocation4], %s212
          %s214 = sshll.u32 [#allocation3], 4
          %s215 = int_to_ptr.vmem [resolvable:$true] %s214
          %220 = dma.hbm_to_vmem [thread:$0]  %s1, 2048, %s215, [#allocation4], 128, 128, 8
        $region16: #{nn_classifier_forward.1} parent=11 // pred_fallthru
          _
        // Predicated region
        $region17: #{nn_classifier_forward.1} parent=11 // pred_check
          %p221 = pneg %p83
        $region18: #{nn_classifier_forward.1} parent=11 // pred_check_branch
          %223 = sbr.rel (%p221) target = $region20
        $region19: #{nn_classifier_forward.1} parent=11 // pred_region
          _
        $region20: #{nn_classifier_forward.1} parent=11 // pred_fallthru
          _
        // Predicated region
        $region21: #{nn_classifier_forward.1} parent=11 // pred_check
          %p224 = pneg %p104
        $region22: #{nn_classifier_forward.1} parent=11 // pred_check_branch
          %226 = sbr.rel (%p224) target = $region24
        $region23: #{nn_classifier_forward.1} parent=11 // pred_region
          %s228 = ssub.s32 2048, 2048
          %229 = vsyncadd [#allocation6], %s228
          %s230 = sshll.u32 [#allocation5], 4
          %s231 = int_to_ptr.vmem [resolvable:$true] %s230
          %236 = dma.hbm_to_vmem [thread:$0]  %s3, 2048, %s231, [#allocation6], 128, 128, 8
        $region24: #{nn_classifier_forward.1} parent=11 // pred_fallthru
          _
        // Predicated region
        $region25: #{nn_classifier_forward.1} parent=11 // pred_check
          %p237 = pneg %p125
        $region26: #{nn_classifier_forward.1} parent=11 // pred_check_branch
          %239 = sbr.rel (%p237) target = $region28
        $region27: #{nn_classifier_forward.1} parent=11 // pred_region
          _
        $region28: #{nn_classifier_forward.1} parent=11 // pred_fallthru
          _
        // Predicated region
        $region29: #{nn_classifier_forward.1} parent=11 // pred_check
          %p240 = pneg %p146
        $region30: #{nn_classifier_forward.1} parent=11 // pred_check_branch
          %242 = sbr.rel (%p240) target = $region32
        $region31: #{nn_classifier_forward.1} parent=11 // pred_region
          %s244 = ssub.s32 2048, 2048
          %245 = vsyncadd [#allocation6], %s244
          %s246 = sshll.u32 [#allocation7], 4
          %s247 = int_to_ptr.vmem [resolvable:$true] %s246
          %252 = dma.hbm_to_vmem [thread:$0]  %s5, 2048, %s247, [#allocation6], 128, 128, 8
        $region32: #{nn_classifier_forward.1} parent=11 // pred_fallthru
          _
        // Predicated region
        $region33: #{nn_classifier_forward.1} parent=11 // pred_check
          %p253 = pneg %p167
        $region34: #{nn_classifier_forward.1} parent=11 // pred_check_branch
          %255 = sbr.rel (%p253) target = $region36
        $region35: #{nn_classifier_forward.1} parent=11 // pred_region
          _
        $region36: #{nn_classifier_forward.1} parent=11 // pred_fallthru
          _
      $region12: #{nn_classifier_forward.1} parent=5 // pred_fallthru
        _
      %p256 = scmp.lt.s32.totalorder %s15, 2
      // Predicated region
      $region37: #{nn_classifier_forward.1} parent=5 // pred_check
        %p257 = pneg %p256
      $region38: #{nn_classifier_forward.1} parent=5 // pred_check_branch
        %259 = sbr.rel (%p257) target = $region40
      $region39: #{nn_classifier_forward.1} parent=5 // pred_region
        // Predicated region
        $region41: #{nn_classifier_forward.1} parent=39 // pred_check
          %p260 = pneg %p35
        $region42: #{nn_classifier_forward.1} parent=39 // pred_check_branch
          %262 = sbr.rel (%p260) target = $region44
        $region43: #{nn_classifier_forward.1} parent=39 // pred_region
          %s263 = smul.u32 4, %s15
          %p264 = scmp.lt.s32.totalorder %s263, 7
          %s265 = scalar_select %p264, %s263, 7
          %s266 = smul.addr %s265, 8
          %s267 = scalar_lea.vmem %s0, %s266
          %s268 = smul.u32 4, %s15
        $region44: #{nn_classifier_forward.1} parent=39 // pred_fallthru
          _
      $region40: #{nn_classifier_forward.1} parent=5 // pred_fallthru
        _
      %p269 = scmp.le.s32.totalorder 1, %s15
      %p270 = scmp.lt.s32.totalorder %s15, 3
      %p271 = pnand %p269, %p270
      %p272 = pneg %p271
      // Predicated region
      $region45: #{nn_classifier_forward.1} parent=5 // pred_check
        _
      $region46: #{nn_classifier_forward.1} parent=5 // pred_check_branch
        %274 = sbr.rel (%p271) target = $region48
      $region47: #{nn_classifier_forward.1} parent=5 // pred_region
        %s275 = ssub.s32 %s15, 1
        // Predicated region
        $region49: #{nn_classifier_forward.1} parent=47 // pred_check
          %p276 = pneg %p62
        $region50: #{nn_classifier_forward.1} parent=47 // pred_check_branch
          %278 = sbr.rel (%p276) target = $region52
        $region51: #{nn_classifier_forward.1} parent=47 // pred_region
          %279 = dma.done [#allocation4], 2048
        $region52: #{nn_classifier_forward.1} parent=47 // pred_fallthru
          _
        // Predicated region
        $region53: #{nn_classifier_forward.1} parent=47 // pred_check
          %p280 = pneg %p104
        $region54: #{nn_classifier_forward.1} parent=47 // pred_check_branch
          %282 = sbr.rel (%p280) target = $region56
        $region55: #{nn_classifier_forward.1} parent=47 // pred_region
          %283 = dma.done [#allocation6], 2048
        $region56: #{nn_classifier_forward.1} parent=47 // pred_fallthru
          _
        // Predicated region
        $region57: #{nn_classifier_forward.1} parent=47 // pred_check
          %p284 = pneg %p146
        $region58: #{nn_classifier_forward.1} parent=47 // pred_check_branch
          %286 = sbr.rel (%p284) target = $region60
        $region59: #{nn_classifier_forward.1} parent=47 // pred_region
          %287 = dma.done [#allocation6], 2048
        $region60: #{nn_classifier_forward.1} parent=47 // pred_fallthru
          _
        %s288 = smul.u32 4, %s20
        %p289 = scmp.lt.s32.totalorder %s288, 7
        %s290 = scalar_select %p289, %s288, 7
        %s291 = smul.addr %s290, 8
        %s292 = scalar_lea.vmem %s0, %s291
        %p293 = pneg %p41
        %p294 = pneg %p38
        %p295 = pneg %p62
        %p296 = pneg %p59
        %p297 = pneg %p83
        %p298 = pneg %p80
        %p299 = pneg %p104
        %p300 = pneg %p101
        %p301 = pneg %p125
        %p302 = pneg %p122
        %p303 = pneg %p146
        %p304 = pneg %p143
        %p305 = pneg %p167
        %p306 = pneg %p164
        %p307 = pneg %p193
        %p308 = pneg %p190
        %s309 = smul.u32 4, %s20
        %p310 = scmp.lt.s32.totalorder %s309, 7
        %s311 = scalar_select %p310, %s309, 7
        %s312 = smul.addr %s311, 8
        %s313 = scalar_lea.vmem %s7, %s312
        %s314 = smul.u32 4, %s20
        %p315 = scmp.lt.s32.totalorder %s314, 7
        %s316 = scalar_select %p315, %s314, 7
        %s317 = smul.addr %s316, 8
        %s318 = scalar_lea.vmem %s0, %s317
        %s319 = smul.u32 4, %s20
        %s320 = smul.u32 4, %s20
        %p321 = scmp.lt.s32.totalorder %s320, 7
        %s322 = scalar_select %p321, %s320, 7
        %s323 = smul.addr %s322, 8
        %s324 = scalar_lea.vmem %s7, %s323
        %s325 = smul.u32 4, %s20
        %326 = vst [vmem:[#allocation2] sm:$0xff] 0.0
        %327 = vst [vmem:[#allocation2 + $0x8] sm:$0xff] 0.0
        %328 = vst [vmem:[#allocation2 + $0x10] sm:$0xff] 0.0
        %329 = vst [vmem:[#allocation2 + $0x18] sm:$0xff] 0.0
        %v330 = vld [vmem:[%s318] sm:$0xff]
        %v331 = vld [vmem:[%s318 + $0x8] sm:$0xff]
        %v332 = vld [vmem:[%s318 + $0x10] sm:$0xff]
        %v333 = vld [vmem:[%s318 + $0x18] sm:$0xff]
        %vm334 = vcmask 130048
        %335 = vst.msk [vmem:[#allocation2] sm:$0xff] %vm334, %v330
        %336 = vst.msk [vmem:[#allocation2 + $0x8] sm:$0xff] %vm334, %v331
        %337 = vst.msk [vmem:[#allocation2 + $0x10] sm:$0xff] %vm334, %v332
        %338 = vst.msk [vmem:[#allocation2 + $0x18] sm:$0xff] %vm334, %v333
        %v339 = vld [vmem:[#allocation2] sm:$0xff]
        %v340 = vld [vmem:[#allocation2 + $0x8] sm:$0xff]
        %v341 = vld [vmem:[#allocation2 + $0x10] sm:$0xff]
        %v342 = vld [vmem:[#allocation2 + $0x18] sm:$0xff]
        %v343 = vld [vmem:[#allocation3] sm:$0xff]
        %v344 = vld [vmem:[#allocation3 + $0x8] sm:$0xff]
        %v345 = vld [vmem:[#allocation3 + $0x10] sm:$0xff]
        %v346 = vld [vmem:[#allocation3 + $0x18] sm:$0xff]
        %v347 = vld [vmem:[#allocation3 + $0x20] sm:$0xff]
        %v348 = vld [vmem:[#allocation3 + $0x28] sm:$0xff]
        %v349 = vld [vmem:[#allocation3 + $0x30] sm:$0xff]
        %v350 = vld [vmem:[#allocation3 + $0x38] sm:$0xff]
        %v351 = vld [vmem:[#allocation3 + $0x40] sm:$0xff]
        %v352 = vld [vmem:[#allocation3 + $0x48] sm:$0xff]
        %v353 = vld [vmem:[#allocation3 + $0x50] sm:$0xff]
        %v354 = vld [vmem:[#allocation3 + $0x58] sm:$0xff]
        %v355 = vld [vmem:[#allocation3 + $0x60] sm:$0xff]
        %v356 = vld [vmem:[#allocation3 + $0x68] sm:$0xff]
        %v357 = vld [vmem:[#allocation3 + $0x70] sm:$0xff]
        %v358 = vld [vmem:[#allocation3 + $0x78] sm:$0xff]
        %v359 = vld [vmem:[%s2] sm:$0x1]
        %v361 = vlaneseq
        %v362 = vshrl.u32 %v361, 7
        %v363 = vsub.s32 0, %v362
        %v364 = vrot.slane %v359, %v363
        %366 = vmatprep.subr.mxu0 0.0
        %367 = vmatpush1.msra.mxu0 %v343
        %368 = vmatprep.subr.mxu0 0.0
        %369 = vmatpush1.msra.mxu0 %v344
        %370 = vmatprep.subr.mxu0 0.0
        %371 = vmatpush1.msra.mxu0 %v345
        %372 = vmatprep.subr.mxu0 0.0
        %373 = vmatpush1.msra.mxu0 %v346
        %374 = vmatprep.subr.mxu0 0.0
        %375 = vmatpush1.msra.mxu0 %v347
        %376 = vmatprep.subr.mxu0 0.0
        %377 = vmatpush1.msra.mxu0 %v348
        %378 = vmatprep.subr.mxu0 0.0
        %379 = vmatpush1.msra.mxu0 %v349
        %380 = vmatprep.subr.mxu0 0.0
        %381 = vmatpush1.msra.mxu0 %v350
        %382 = vmatprep.subr.mxu0 0.0
        %383 = vmatpush1.msra.mxu0 %v351
        %384 = vmatprep.subr.mxu0 0.0
        %385 = vmatpush1.msra.mxu0 %v352
        %386 = vmatprep.subr.mxu0 0.0
        %387 = vmatpush1.msra.mxu0 %v353
        %388 = vmatprep.subr.mxu0 0.0
        %389 = vmatpush1.msra.mxu0 %v354
        %390 = vmatprep.subr.mxu0 0.0
        %391 = vmatpush1.msra.mxu0 %v355
        %392 = vmatprep.subr.mxu0 0.0
        %393 = vmatpush1.msra.mxu0 %v356
        %394 = vmatprep.subr.mxu0 0.0
        %395 = vmatpush1.msra.mxu0 %v357
        %396 = vmatprep.subr.mxu0 0.0
        %397 = vmatpush1.msra.mxu0 %v358
        %398 = vmatprep.subr.mxu0 0.0
        %399 = vmatpush1.msra.mxu0 0.0
        %400 = vmatprep.subr.mxu0 0.0
        %401 = vmatpush1.msra.mxu0 0.0
        %402 = vmatprep.subr.mxu0 0.0
        %403 = vmatpush1.msra.mxu0 0.0
        %404 = vmatprep.subr.mxu0 0.0
        %405 = vmatpush1.msra.mxu0 0.0
        %406 = vmatprep.subr.mxu0 0.0
        %407 = vmatpush1.msra.mxu0 0.0
        %408 = vmatprep.subr.mxu0 0.0
        %409 = vmatpush1.msra.mxu0 0.0
        %410 = vmatprep.subr.mxu0 0.0
        %411 = vmatpush1.msra.mxu0 0.0
        %412 = vmatprep.subr.mxu0 0.0
        %413 = vmatpush1.msra.mxu0 0.0
        %414 = vmatprep.subr.mxu0 0.0
        %415 = vmatpush1.msra.mxu0 0.0
        %416 = vmatprep.subr.mxu0 0.0
        %417 = vmatpush1.msra.mxu0 0.0
        %418 = vmatprep.subr.mxu0 0.0
        %419 = vmatpush1.msra.mxu0 0.0
        %420 = vmatprep.subr.mxu0 0.0
        %421 = vmatpush1.msra.mxu0 0.0
        %422 = vmatprep.subr.mxu0 0.0
        %423 = vmatpush1.msra.mxu0 0.0
        %424 = vmatprep.subr.mxu0 0.0
        %425 = vmatpush1.msra.mxu0 0.0
        %426 = vmatprep.subr.mxu0 0.0
        %427 = vmatpush1.msra.mxu0 0.0
        %428 = vmatprep.subr.mxu0 0.0
        %429 = vmatpush1.msra.mxu0 0.0
        %430 = vmatprep.mubr.f32.mxu0 0.0
        %431 = vmatmul.mubr.f32.gmra.mrb[0].mxu0 %v339
        %v432 = vpop.f32.mrb[0].mxu0
        %v433 = vadd.f32 %v364, %v432
        %v434 = vpop.f32.mrb[0].mxu0
        %435 = vmatprep.mubr.f32.mxu0 0.0
        %436 = vmatmul.mubr.f32.gmra.mrb[0].mxu0 %v340
        %v437 = vpop.f32.mrb[0].mxu0
        %v438 = vadd.f32 %v364, %v437
        %v439 = vpop.f32.mrb[0].mxu0
        %440 = vmatprep.mubr.f32.mxu0 0.0
        %441 = vmatmul.mubr.f32.gmra.mrb[0].mxu0 %v341
        %v442 = vpop.f32.mrb[0].mxu0
        %v443 = vadd.f32 %v364, %v442
        %v444 = vpop.f32.mrb[0].mxu0
        %445 = vmatprep.mubr.f32.mxu0 0.0
        %446 = vmatmul.mubr.f32.gmra.mrb[0].mxu0 %v342
        %v447 = vpop.f32.mrb[0].mxu0
        %v448 = vadd.f32 %v364, %v447
        %v449 = vpop.f32.mrb[0].mxu0
        %450 = vdwg.mxu0
        %v451 = vmax.f32 %v433, 0.0
        %v452 = vmax.f32 %v438, 0.0
        %v453 = vmax.f32 %v443, 0.0
        %v454 = vmax.f32 %v448, 0.0
        %v455 = vld [vmem:[#allocation5] sm:$0xff]
        %v456 = vld [vmem:[#allocation5 + $0x8] sm:$0xff]
        %v457 = vld [vmem:[#allocation5 + $0x10] sm:$0xff]
        %v458 = vld [vmem:[#allocation5 + $0x18] sm:$0xff]
        %v459 = vld [vmem:[#allocation5 + $0x20] sm:$0xff]
        %v460 = vld [vmem:[#allocation5 + $0x28] sm:$0xff]
        %v461 = vld [vmem:[#allocation5 + $0x30] sm:$0xff]
        %v462 = vld [vmem:[#allocation5 + $0x38] sm:$0xff]
        %v463 = vld [vmem:[#allocation5 + $0x40] sm:$0xff]
        %v464 = vld [vmem:[#allocation5 + $0x48] sm:$0xff]
        %v465 = vld [vmem:[#allocation5 + $0x50] sm:$0xff]
        %v466 = vld [vmem:[#allocation5 + $0x58] sm:$0xff]
        %v467 = vld [vmem:[#allocation5 + $0x60] sm:$0xff]
        %v468 = vld [vmem:[#allocation5 + $0x68] sm:$0xff]
        %v469 = vld [vmem:[#allocation5 + $0x70] sm:$0xff]
        %v470 = vld [vmem:[#allocation5 + $0x78] sm:$0xff]
        %v471 = vld [vmem:[%s4] sm:$0x1]
        %v473 = vlaneseq
        %v474 = vshrl.u32 %v473, 7
        %v475 = vsub.s32 0, %v474
        %v476 = vrot.slane %v471, %v475
        %478 = vmatprep.subr.mxu0 0.0
        %479 = vmatpush1.msra.mxu0 %v455
        %480 = vmatprep.subr.mxu0 0.0
        %481 = vmatpush1.msra.mxu0 %v456
        %482 = vmatprep.subr.mxu0 0.0
        %483 = vmatpush1.msra.mxu0 %v457
        %484 = vmatprep.subr.mxu0 0.0
        %485 = vmatpush1.msra.mxu0 %v458
        %486 = vmatprep.subr.mxu0 0.0
        %487 = vmatpush1.msra.mxu0 %v459
        %488 = vmatprep.subr.mxu0 0.0
        %489 = vmatpush1.msra.mxu0 %v460
        %490 = vmatprep.subr.mxu0 0.0
        %491 = vmatpush1.msra.mxu0 %v461
        %492 = vmatprep.subr.mxu0 0.0
        %493 = vmatpush1.msra.mxu0 %v462
        %494 = vmatprep.subr.mxu0 0.0
        %495 = vmatpush1.msra.mxu0 %v463
        %496 = vmatprep.subr.mxu0 0.0
        %497 = vmatpush1.msra.mxu0 %v464
        %498 = vmatprep.subr.mxu0 0.0
        %499 = vmatpush1.msra.mxu0 %v465
        %500 = vmatprep.subr.mxu0 0.0
        %501 = vmatpush1.msra.mxu0 %v466
        %502 = vmatprep.subr.mxu0 0.0
        %503 = vmatpush1.msra.mxu0 %v467
        %504 = vmatprep.subr.mxu0 0.0
        %505 = vmatpush1.msra.mxu0 %v468
        %506 = vmatprep.subr.mxu0 0.0
        %507 = vmatpush1.msra.mxu0 %v469
        %508 = vmatprep.subr.mxu0 0.0
        %509 = vmatpush1.msra.mxu0 %v470
        %510 = vmatprep.subr.mxu0 0.0
        %511 = vmatpush1.msra.mxu0 0.0
        %512 = vmatprep.subr.mxu0 0.0
        %513 = vmatpush1.msra.mxu0 0.0
        %514 = vmatprep.subr.mxu0 0.0
        %515 = vmatpush1.msra.mxu0 0.0
        %516 = vmatprep.subr.mxu0 0.0
        %517 = vmatpush1.msra.mxu0 0.0
        %518 = vmatprep.subr.mxu0 0.0
        %519 = vmatpush1.msra.mxu0 0.0
        %520 = vmatprep.subr.mxu0 0.0
        %521 = vmatpush1.msra.mxu0 0.0
        %522 = vmatprep.subr.mxu0 0.0
        %523 = vmatpush1.msra.mxu0 0.0
        %524 = vmatprep.subr.mxu0 0.0
        %525 = vmatpush1.msra.mxu0 0.0
        %526 = vmatprep.subr.mxu0 0.0
        %527 = vmatpush1.msra.mxu0 0.0
        %528 = vmatprep.subr.mxu0 0.0
        %529 = vmatpush1.msra.mxu0 0.0
        %530 = vmatprep.subr.mxu0 0.0
        %531 = vmatpush1.msra.mxu0 0.0
        %532 = vmatprep.subr.mxu0 0.0
        %533 = vmatpush1.msra.mxu0 0.0
        %534 = vmatprep.subr.mxu0 0.0
        %535 = vmatpush1.msra.mxu0 0.0
        %536 = vmatprep.subr.mxu0 0.0
        %537 = vmatpush1.msra.mxu0 0.0
        %538 = vmatprep.subr.mxu0 0.0
        %539 = vmatpush1.msra.mxu0 0.0
        %540 = vmatprep.subr.mxu0 0.0
        %541 = vmatpush1.msra.mxu0 0.0
        %542 = vmatprep.mubr.f32.mxu0 0.0
        %543 = vmatmul.mubr.f32.gmra.mrb[0].mxu0 %v451
        %v544 = vpop.f32.mrb[0].mxu0
        %v545 = vadd.f32 %v476, %v544
        %v546 = vpop.f32.mrb[0].mxu0
        %547 = vmatprep.mubr.f32.mxu0 0.0
        %548 = vmatmul.mubr.f32.gmra.mrb[0].mxu0 %v452
        %v549 = vpop.f32.mrb[0].mxu0
        %v550 = vadd.f32 %v476, %v549
        %v551 = vpop.f32.mrb[0].mxu0
        %552 = vmatprep.mubr.f32.mxu0 0.0
        %553 = vmatmul.mubr.f32.gmra.mrb[0].mxu0 %v453
        %v554 = vpop.f32.mrb[0].mxu0
        %v555 = vadd.f32 %v476, %v554
        %v556 = vpop.f32.mrb[0].mxu0
        %557 = vmatprep.mubr.f32.mxu0 0.0
        %558 = vmatmul.mubr.f32.gmra.mrb[0].mxu0 %v454
        %v559 = vpop.f32.mrb[0].mxu0
        %v560 = vadd.f32 %v476, %v559
        %v561 = vpop.f32.mrb[0].mxu0
        %562 = vdwg.mxu0
        %v563 = vmax.f32 %v545, 0.0
        %v564 = vmax.f32 %v550, 0.0
        %v565 = vmax.f32 %v555, 0.0
        %v566 = vmax.f32 %v560, 0.0
        %v567 = vld [vmem:[#allocation7] sm:$0xff]
        %v568 = vld [vmem:[#allocation7 + $0x8] sm:$0xff]
        %v569 = vld [vmem:[#allocation7 + $0x10] sm:$0xff]
        %v570 = vld [vmem:[#allocation7 + $0x18] sm:$0xff]
        %v571 = vld [vmem:[#allocation7 + $0x20] sm:$0xff]
        %v572 = vld [vmem:[#allocation7 + $0x28] sm:$0xff]
        %v573 = vld [vmem:[#allocation7 + $0x30] sm:$0xff]
        %v574 = vld [vmem:[#allocation7 + $0x38] sm:$0xff]
        %v575 = vld [vmem:[#allocation7 + $0x40] sm:$0xff]
        %v576 = vld [vmem:[#allocation7 + $0x48] sm:$0xff]
        %v577 = vld [vmem:[#allocation7 + $0x50] sm:$0xff]
        %v578 = vld [vmem:[#allocation7 + $0x58] sm:$0xff]
        %v579 = vld [vmem:[#allocation7 + $0x60] sm:$0xff]
        %v580 = vld [vmem:[#allocation7 + $0x68] sm:$0xff]
        %v581 = vld [vmem:[#allocation7 + $0x70] sm:$0xff]
        %v582 = vld [vmem:[#allocation7 + $0x78] sm:$0xff]
        %v583 = vld [vmem:[%s6] sm:$0x1]
        %v585 = vlaneseq
        %v586 = vshrl.u32 %v585, 7
        %v587 = vsub.s32 0, %v586
        %v588 = vrot.slane %v583, %v587
        %590 = vmatprep.subr.mxu0 0.0
        %591 = vmatpush1.msra.mxu0 %v567
        %592 = vmatprep.subr.mxu0 0.0
        %593 = vmatpush1.msra.mxu0 %v568
        %594 = vmatprep.subr.mxu0 0.0
        %595 = vmatpush1.msra.mxu0 %v569
        %596 = vmatprep.subr.mxu0 0.0
        %597 = vmatpush1.msra.mxu0 %v570
        %598 = vmatprep.subr.mxu0 0.0
        %599 = vmatpush1.msra.mxu0 %v571
        %600 = vmatprep.subr.mxu0 0.0
        %601 = vmatpush1.msra.mxu0 %v572
        %602 = vmatprep.subr.mxu0 0.0
        %603 = vmatpush1.msra.mxu0 %v573
        %604 = vmatprep.subr.mxu0 0.0
        %605 = vmatpush1.msra.mxu0 %v574
        %606 = vmatprep.subr.mxu0 0.0
        %607 = vmatpush1.msra.mxu0 %v575
        %608 = vmatprep.subr.mxu0 0.0
        %609 = vmatpush1.msra.mxu0 %v576
        %610 = vmatprep.subr.mxu0 0.0
        %611 = vmatpush1.msra.mxu0 %v577
        %612 = vmatprep.subr.mxu0 0.0
        %613 = vmatpush1.msra.mxu0 %v578
        %614 = vmatprep.subr.mxu0 0.0
        %615 = vmatpush1.msra.mxu0 %v579
        %616 = vmatprep.subr.mxu0 0.0
        %617 = vmatpush1.msra.mxu0 %v580
        %618 = vmatprep.subr.mxu0 0.0
        %619 = vmatpush1.msra.mxu0 %v581
        %620 = vmatprep.subr.mxu0 0.0
        %621 = vmatpush1.msra.mxu0 %v582
        %622 = vmatprep.subr.mxu0 0.0
        %623 = vmatpush1.msra.mxu0 0.0
        %624 = vmatprep.subr.mxu0 0.0
        %625 = vmatpush1.msra.mxu0 0.0
        %626 = vmatprep.subr.mxu0 0.0
        %627 = vmatpush1.msra.mxu0 0.0
        %628 = vmatprep.subr.mxu0 0.0
        %629 = vmatpush1.msra.mxu0 0.0
        %630 = vmatprep.subr.mxu0 0.0
        %631 = vmatpush1.msra.mxu0 0.0
        %632 = vmatprep.subr.mxu0 0.0
        %633 = vmatpush1.msra.mxu0 0.0
        %634 = vmatprep.subr.mxu0 0.0
        %635 = vmatpush1.msra.mxu0 0.0
        %636 = vmatprep.subr.mxu0 0.0
        %637 = vmatpush1.msra.mxu0 0.0
        %638 = vmatprep.subr.mxu0 0.0
        %639 = vmatpush1.msra.mxu0 0.0
        %640 = vmatprep.subr.mxu0 0.0
        %641 = vmatpush1.msra.mxu0 0.0
        %642 = vmatprep.subr.mxu0 0.0
        %643 = vmatpush1.msra.mxu0 0.0
        %644 = vmatprep.subr.mxu0 0.0
        %645 = vmatpush1.msra.mxu0 0.0
        %646 = vmatprep.subr.mxu0 0.0
        %647 = vmatpush1.msra.mxu0 0.0
        %648 = vmatprep.subr.mxu0 0.0
        %649 = vmatpush1.msra.mxu0 0.0
        %650 = vmatprep.subr.mxu0 0.0
        %651 = vmatpush1.msra.mxu0 0.0
        %652 = vmatprep.subr.mxu0 0.0
        %653 = vmatpush1.msra.mxu0 0.0
        %654 = vmatprep.mubr.f32.mxu0 0.0
        %655 = vmatmul.mubr.f32.gmra.mrb[0].mxu0 %v563
        %v656 = vpop.f32.mrb[0].mxu0
        %v657 = vadd.f32 %v588, %v656
        %v658 = vpop.f32.mrb[0].mxu0
        %659 = vmatprep.mubr.f32.mxu0 0.0
        %660 = vmatmul.mubr.f32.gmra.mrb[0].mxu0 %v564
        %v661 = vpop.f32.mrb[0].mxu0
        %v662 = vadd.f32 %v588, %v661
        %v663 = vpop.f32.mrb[0].mxu0
        %664 = vmatprep.mubr.f32.mxu0 0.0
        %665 = vmatmul.mubr.f32.gmra.mrb[0].mxu0 %v565
        %v666 = vpop.f32.mrb[0].mxu0
        %v667 = vadd.f32 %v588, %v666
        %v668 = vpop.f32.mrb[0].mxu0
        %669 = vmatprep.mubr.f32.mxu0 0.0
        %670 = vmatmul.mubr.f32.gmra.mrb[0].mxu0 %v566
        %v671 = vpop.f32.mrb[0].mxu0
        %v672 = vadd.f32 %v588, %v671
        %v673 = vpop.f32.mrb[0].mxu0
        %674 = vdwg.mxu0
        %vm675 = vcmask 23552
        %676 = vst.msk [vmem:[%s324] sm:$0xff] %vm675, %v657
        %677 = vst.msk [vmem:[%s324 + $0x8] sm:$0xff] %vm675, %v662
        %678 = vst.msk [vmem:[%s324 + $0x10] sm:$0xff] %vm675, %v667
        %679 = vst.msk [vmem:[%s324 + $0x18] sm:$0xff] %vm675, %v672
        %s680 = smul.u32 4, %s20
        %p681 = scmp.lt.s32.totalorder %s680, 7
        %s682 = scalar_select %p681, %s680, 7
        %s683 = smul.addr %s682, 8
        %s684 = scalar_lea.vmem %s7, %s683
        // Predicated region
        $region61: #{nn_classifier_forward.1} parent=47 // pred_check
          %p685 = pneg %p190
        $region62: #{nn_classifier_forward.1} parent=47 // pred_check_branch
          %687 = sbr.rel (%p685) target = $region64
        $region63: #{nn_classifier_forward.1} parent=47 // pred_region
          %s688 = smul.u32 4, %s20
        $region64: #{nn_classifier_forward.1} parent=47 // pred_fallthru
          _
      $region48: #{nn_classifier_forward.1} parent=5 // pred_fallthru
        _
      %p689 = scmp.le.s32.totalorder 2, %s15
      // Predicated region
      $region65: #{nn_classifier_forward.1} parent=5 // pred_check
        %p690 = pneg %p689
      $region66: #{nn_classifier_forward.1} parent=5 // pred_check_branch
        %692 = sbr.rel (%p690) target = $region68
      $region67: #{nn_classifier_forward.1} parent=5 // pred_region
        %s693 = ssub.s32 %s15, 2
        // Predicated region
        $region69: #{nn_classifier_forward.1} parent=67 // pred_check
          %p694 = pneg %p196
        $region70: #{nn_classifier_forward.1} parent=67 // pred_check_branch
          %696 = sbr.rel (%p694) target = $region72
        $region71: #{nn_classifier_forward.1} parent=67 // pred_region
          %s697 = smul.u32 4, %s21
          %p698 = scmp.lt.s32.totalorder %s697, 7
          %s699 = scalar_select %p698, %s697, 7
          %s700 = smul.addr %s699, 8
          %s701 = scalar_lea.vmem %s7, %s700
        $region72: #{nn_classifier_forward.1} parent=67 // pred_fallthru
          _
      $region68: #{nn_classifier_forward.1} parent=5 // pred_fallthru
        _
    $region6: #{nn_classifier_forward.1} parent=1 // loop_footer
      %s19 = sadd.s32 1, %s15
    $region7: #{nn_classifier_forward.1} parent=1 // loop_footer_branch
      %14 = sbr.rel target = $region3
    $region8: #{nn_classifier_forward.1} parent=1 // loop_exit
      _
    %702 = vsyncpa [#allocation4], 1
    %s703 = scalar_lea.sflag [#allocation4], 1
    %704 = vsyncpa %s703, 1
    %705 = vsyncpa [#allocation6], 1

</llo_original>
